<compile_context>
chip_gen: v7x
topology: tpu7x:2x2x1
jax: 0.10.0
libtpu: 0.0.40
codegen_flags: <defaults>
</compile_context>

<pallas_src>
import jax
import jax.numpy as jnp
from jax.experimental import pallas as pl
from jax.experimental.pallas import tpu as pltpu


def _window_mlp_kernel(idx_ref, tbl_ref, w1_ref, w2_ref, wo_ref, b_ref, out_ref):
    # idx_ref : (B, Wwin) int32 in VMEM      (token indices)
    # tbl_ref : (vocab, E) f32 in VMEM       (word embedding table)
    # w1_ref  : (Wwin*E, H)  -- already folded (W1_top + W1_bot)
    # w2_ref  : (H, H)
    # wo_ref  : (H, O)
    # b_ref   : (3, max(H, O)) packed biases [b1; b2; bo(padded)]
    B, Wwin = idx_ref.shape
    vocab, E = tbl_ref.shape
    H = w2_ref.shape[0]
    O = wo_ref.shape[1]

    tbl = tbl_ref[...]                                         # (vocab, E)
    vocab_iota = jax.lax.broadcasted_iota(jnp.int32, (B, vocab), 1)

    b1 = b_ref[0:1, :H]
    b2 = b_ref[1:2, :H]
    bo = b_ref[2:3, :O]

    # Fused embedding gather via one-hot matmuls, accumulated straight into the
    # first layer's pre-activation (no scratch, no dynamic indexing).
    acc = jnp.zeros((B, H), jnp.float32) + b1
    for w in range(Wwin):                                      # Wwin is tiny: static unroll
        tok_w = idx_ref[:, w:w + 1]                            # (B, 1) int32, static lane slice
        onehot_w = (vocab_iota == tok_w).astype(jnp.float32)   # (B, vocab)
        e_w = jnp.dot(onehot_w, tbl,
                      preferred_element_type=jnp.float32)      # (B, E) == table[idx[:, w]] exactly
        acc = acc + jnp.dot(e_w, w1_ref[w * E:(w + 1) * E, :],
                            preferred_element_type=jnp.float32)

    h0 = jax.nn.sigmoid(acc)
    h1 = jax.nn.sigmoid(
        jnp.dot(h0, w2_ref[...], preferred_element_type=jnp.float32) + b2
    )
    z = jnp.dot(h1, wo_ref[...], preferred_element_type=jnp.float32) + bo

    # Numerically stable log_softmax(dim=1).
    m = jnp.max(z, axis=1, keepdims=True)
    e = jnp.exp(z - m)
    lse = jnp.log(jnp.sum(e, axis=1, keepdims=True)) + m
    out_ref[...] = z - lse


@jax.jit
def window_classifier_forward(inputs, pos, params):
    """inputs, pos: int32 (B, window_width). Returns log-probs (B, output_size)."""
    del pos  # pos embeddings are computed-but-unused in the original module (bug).

    word_embed = params["word_embed"]          # (vocab, E)
    B, Wwin = inputs.shape
    vocab, E = word_embed.shape
    K = Wwin * E

    # Fold the duplicated concat into W1 (exactly equivalent to the original
    # x = concat([embeds_flat, embeds_flat]) @ W1, bug included).
    w1 = params["w1"]                           # (2*K, H)
    w1_eff = w1[:K, :] + w1[K:, :]              # (K, H)

    w2, wo = params["w2"], params["wo"]         # (H, H), (H, O)
    H = w2.shape[0]
    O = wo.shape[1]

    # Pack the three bias vectors into a single operand.
    bw = max(H, O)
    b_packed = jnp.zeros((3, bw), jnp.float32)
    b_packed = b_packed.at[0, :H].set(params["b1"].reshape(-1))
    b_packed = b_packed.at[1, :H].set(params["b2"].reshape(-1))
    b_packed = b_packed.at[2, :O].set(params["bo"].reshape(-1))

    flops = 2 * B * (Wwin * vocab * E + K * H + H * H + H * O)
    transcendentals = B * (2 * H + O + 1)       # sigmoids + softmax exp/log
    bytes_accessed = 4 * (inputs.size + word_embed.size + w1_eff.size
                          + w2.size + wo.size + b_packed.size + B * O)

    vmem = pl.BlockSpec(memory_space=pltpu.MemorySpace.VMEM)

    out = pl.pallas_call(
        _window_mlp_kernel,
        out_shape=jax.ShapeDtypeStruct((B, O), jnp.float32),
        in_specs=[vmem, vmem, vmem, vmem, vmem, vmem],
        out_specs=vmem,
        cost_estimate=pl.CostEstimate(flops=flops,
                                      transcendentals=transcendentals,
                                      bytes_accessed=bytes_accessed),
    )(inputs.astype(jnp.int32), word_embed, w1_eff, w2, wo, b_packed)
    return out


def make_params(key, vocab_size, pos_size, embedding_size, window_size,
                hidden_size, output_size):
    """Deterministic synthetic parameters with the shapes implied by __init__.

    Linear weights are stored transposed: (in_features, out_features)."""
    win_width = window_size * 2 + 1
    in_feat = 2 * embedding_size * win_width
    ks = jax.random.split(key, 9)
    scale = 0.1
    return {
        "word_embed": scale * jax.random.normal(ks[0], (vocab_size, embedding_size), jnp.float32),
        "pos_embed":  scale * jax.random.normal(ks[1], (pos_size, embedding_size), jnp.float32),
        "w1": scale * jax.random.normal(ks[2], (in_feat, hidden_size), jnp.float32),
        "b1": scale * jax.random.normal(ks[3], (1, hidden_size), jnp.float32),
        "w2": scale * jax.random.normal(ks[4], (hidden_size, hidden_size), jnp.float32),
        "b2": scale * jax.random.normal(ks[5], (1, hidden_size), jnp.float32),
        "wo": scale * jax.random.normal(ks[6], (hidden_size, output_size), jnp.float32),
        "bo": scale * jax.random.normal(ks[7], (1, output_size), jnp.float32),
    }


if __name__ == "__main__":
    # Small, module-consistent shapes.
    vocab_size = 50
    pos_size = 12
    embedding_size = 16
    window_size = 2              # window width = 2*2 + 1 = 5
    hidden_size = 32
    output_size = 8
    batch_size = 8
    win_width = window_size * 2 + 1

    key = jax.random.PRNGKey(0)
    kp, ki, kq = jax.random.split(key, 3)
    params = make_params(kp, vocab_size, pos_size, embedding_size,
                         window_size, hidden_size, output_size)

    inputs = jax.random.randint(ki, (batch_size, win_width), 0, vocab_size, jnp.int32)
    pos = jax.random.randint(kq, (batch_size, win_width), 0, pos_size, jnp.int32)

    out = window_classifier_forward(inputs, pos, params)
    out = jax.block_until_ready(out)

    # Plain-JAX reference reproducing the original module math (bug included):
    # proves the W1-fold / one-hot-matmul gather are exactly equivalent.
    embeds = jnp.take(params["word_embed"], inputs, axis=0).reshape(batch_size, -1)
    x_full = jnp.concatenate([embeds, embeds], axis=1)
    h0 = jax.nn.sigmoid(x_full @ params["w1"] + params["b1"])
    h1 = jax.nn.sigmoid(h0 @ params["w2"] + params["b2"])
    ref = jax.nn.log_softmax(h1 @ params["wo"] + params["bo"], axis=1)

    assert out.shape == (batch_size, output_size)
    assert bool(jnp.allclose(out, ref, atol=1e-5, rtol=1e-5))
    row_sums = jnp.sum(jnp.exp(out), axis=1)
    assert bool(jnp.all(jnp.abs(row_sums - 1.0) < 1e-4))

    print("KERNEL_OK")
</pallas_src>

<mosaic_0001>
module attributes {stable_mosaic.version = 11 : i64} {
  func.func @_window_mlp_kernel(%arg0: memref<8x5xi32, #tpu.memory_space<vmem>>, %arg1: memref<50x16xf32, #tpu.memory_space<vmem>>, %arg2: memref<80x32xf32, #tpu.memory_space<vmem>>, %arg3: memref<32x32xf32, #tpu.memory_space<vmem>>, %arg4: memref<32x8xf32, #tpu.memory_space<vmem>>, %arg5: memref<3x32xf32, #tpu.memory_space<vmem>>, %arg6: memref<8x8xf32, #tpu.memory_space<vmem>>) attributes {dimension_semantics = [], scalar_prefetch = 0 : i64, scratch_operands = 0 : i64, tpu.core_type = #tpu.core_type<tc>} {
    %c0 = arith.constant 0 : index
    %c0_0 = arith.constant 0 : index
    %0 = vector.load %arg1[%c0, %c0_0] : memref<50x16xf32, #tpu.memory_space<vmem>>, vector<50x16xf32>
    %1 = tpu.iota {dimensions = array<i32: 1>} : vector<8x50xi32>
    %c0_1 = arith.constant 0 : index
    %c0_2 = arith.constant 0 : index
    %2 = vector.load %arg5[%c0_1, %c0_2] : memref<3x32xf32, #tpu.memory_space<vmem>>, vector<1x32xf32>
    %c1 = arith.constant 1 : index
    %c0_3 = arith.constant 0 : index
    %3 = vector.load %arg5[%c1, %c0_3] : memref<3x32xf32, #tpu.memory_space<vmem>>, vector<1x32xf32>
    %c2 = arith.constant 2 : index
    %c0_4 = arith.constant 0 : index
    %4 = vector.load %arg5[%c2, %c0_4] : memref<3x32xf32, #tpu.memory_space<vmem>>, vector<1x8xf32>
    %cst = arith.constant 0.000000e+00 : f32
    %5 = vector.broadcast %cst : f32 to vector<8x32xf32>
    %6 = vector.broadcast %2 : vector<1x32xf32> to vector<8x32xf32>
    %7 = arith.addf %5, %6 : vector<8x32xf32>
    %c0_5 = arith.constant 0 : index
    %c0_6 = arith.constant 0 : index
    %8 = vector.load %arg0[%c0_5, %c0_6] : memref<8x5xi32, #tpu.memory_space<vmem>>, vector<8x1xi32>
    %9 = vector.broadcast %8 : vector<8x1xi32> to vector<8x50xi32>
    %10 = arith.cmpi eq, %1, %9 : vector<8x50xi32>
    %11 = arith.extui %10 : vector<8x50xi1> to vector<8x50xi32>
    %12 = arith.sitofp %11 : vector<8x50xi32> to vector<8x50xf32>
    %cst_7 = arith.constant dense<0.000000e+00> : vector<8x16xf32>
    %13 = tpu.matmul %12, %0, %cst_7 {dimension_numbers = #tpu.dot_dimension_numbers<[1], [0], [0], [1], [0, 0, 1, 1], [], []>} : vector<8x50xf32>, vector<50x16xf32>, vector<8x16xf32> -> vector<8x16xf32>
    %c0_8 = arith.constant 0 : index
    %c0_9 = arith.constant 0 : index
    %14 = vector.load %arg2[%c0_8, %c0_9] : memref<80x32xf32, #tpu.memory_space<vmem>>, vector<16x32xf32>
    %cst_10 = arith.constant dense<0.000000e+00> : vector<8x32xf32>
    %15 = tpu.matmul %13, %14, %cst_10 {dimension_numbers = #tpu.dot_dimension_numbers<[1], [0], [0], [1], [0, 0, 1, 1], [], []>} : vector<8x16xf32>, vector<16x32xf32>, vector<8x32xf32> -> vector<8x32xf32>
    %16 = arith.addf %7, %15 : vector<8x32xf32>
    %c0_11 = arith.constant 0 : index
    %c1_12 = arith.constant 1 : index
    %17 = vector.load %arg0[%c0_11, %c1_12] : memref<8x5xi32, #tpu.memory_space<vmem>>, vector<8x1xi32>
    %18 = vector.broadcast %17 : vector<8x1xi32> to vector<8x50xi32>
    %19 = arith.cmpi eq, %1, %18 : vector<8x50xi32>
    %20 = arith.extui %19 : vector<8x50xi1> to vector<8x50xi32>
    %21 = arith.sitofp %20 : vector<8x50xi32> to vector<8x50xf32>
    %cst_13 = arith.constant dense<0.000000e+00> : vector<8x16xf32>
    %22 = tpu.matmul %21, %0, %cst_13 {dimension_numbers = #tpu.dot_dimension_numbers<[1], [0], [0], [1], [0, 0, 1, 1], [], []>} : vector<8x50xf32>, vector<50x16xf32>, vector<8x16xf32> -> vector<8x16xf32>
    %c16 = arith.constant 16 : index
    %c0_14 = arith.constant 0 : index
    %23 = vector.load %arg2[%c16, %c0_14] : memref<80x32xf32, #tpu.memory_space<vmem>>, vector<16x32xf32>
    %cst_15 = arith.constant dense<0.000000e+00> : vector<8x32xf32>
    %24 = tpu.matmul %22, %23, %cst_15 {dimension_numbers = #tpu.dot_dimension_numbers<[1], [0], [0], [1], [0, 0, 1, 1], [], []>} : vector<8x16xf32>, vector<16x32xf32>, vector<8x32xf32> -> vector<8x32xf32>
    %25 = arith.addf %16, %24 : vector<8x32xf32>
    %c0_16 = arith.constant 0 : index
    %c2_17 = arith.constant 2 : index
    %26 = vector.load %arg0[%c0_16, %c2_17] : memref<8x5xi32, #tpu.memory_space<vmem>>, vector<8x1xi32>
    %27 = vector.broadcast %26 : vector<8x1xi32> to vector<8x50xi32>
    %28 = arith.cmpi eq, %1, %27 : vector<8x50xi32>
    %29 = arith.extui %28 : vector<8x50xi1> to vector<8x50xi32>
    %30 = arith.sitofp %29 : vector<8x50xi32> to vector<8x50xf32>
    %cst_18 = arith.constant dense<0.000000e+00> : vector<8x16xf32>
    %31 = tpu.matmul %30, %0, %cst_18 {dimension_numbers = #tpu.dot_dimension_numbers<[1], [0], [0], [1], [0, 0, 1, 1], [], []>} : vector<8x50xf32>, vector<50x16xf32>, vector<8x16xf32> -> vector<8x16xf32>
    %c32 = arith.constant 32 : index
    %c0_19 = arith.constant 0 : index
    %32 = vector.load %arg2[%c32, %c0_19] : memref<80x32xf32, #tpu.memory_space<vmem>>, vector<16x32xf32>
    %cst_20 = arith.constant dense<0.000000e+00> : vector<8x32xf32>
    %33 = tpu.matmul %31, %32, %cst_20 {dimension_numbers = #tpu.dot_dimension_numbers<[1], [0], [0], [1], [0, 0, 1, 1], [], []>} : vector<8x16xf32>, vector<16x32xf32>, vector<8x32xf32> -> vector<8x32xf32>
    %34 = arith.addf %25, %33 : vector<8x32xf32>
    %c0_21 = arith.constant 0 : index
    %c3 = arith.constant 3 : index
    %35 = vector.load %arg0[%c0_21, %c3] : memref<8x5xi32, #tpu.memory_space<vmem>>, vector<8x1xi32>
    %36 = vector.broadcast %35 : vector<8x1xi32> to vector<8x50xi32>
    %37 = arith.cmpi eq, %1, %36 : vector<8x50xi32>
    %38 = arith.extui %37 : vector<8x50xi1> to vector<8x50xi32>
    %39 = arith.sitofp %38 : vector<8x50xi32> to vector<8x50xf32>
    %cst_22 = arith.constant dense<0.000000e+00> : vector<8x16xf32>
    %40 = tpu.matmul %39, %0, %cst_22 {dimension_numbers = #tpu.dot_dimension_numbers<[1], [0], [0], [1], [0, 0, 1, 1], [], []>} : vector<8x50xf32>, vector<50x16xf32>, vector<8x16xf32> -> vector<8x16xf32>
    %c48 = arith.constant 48 : index
    %c0_23 = arith.constant 0 : index
    %41 = vector.load %arg2[%c48, %c0_23] : memref<80x32xf32, #tpu.memory_space<vmem>>, vector<16x32xf32>
    %cst_24 = arith.constant dense<0.000000e+00> : vector<8x32xf32>
    %42 = tpu.matmul %40, %41, %cst_24 {dimension_numbers = #tpu.dot_dimension_numbers<[1], [0], [0], [1], [0, 0, 1, 1], [], []>} : vector<8x16xf32>, vector<16x32xf32>, vector<8x32xf32> -> vector<8x32xf32>
    %43 = arith.addf %34, %42 : vector<8x32xf32>
    %c0_25 = arith.constant 0 : index
    %c4 = arith.constant 4 : index
    %44 = vector.load %arg0[%c0_25, %c4] : memref<8x5xi32, #tpu.memory_space<vmem>>, vector<8x1xi32>
    %45 = vector.broadcast %44 : vector<8x1xi32> to vector<8x50xi32>
    %46 = arith.cmpi eq, %1, %45 : vector<8x50xi32>
    %47 = arith.extui %46 : vector<8x50xi1> to vector<8x50xi32>
    %48 = arith.sitofp %47 : vector<8x50xi32> to vector<8x50xf32>
    %cst_26 = arith.constant dense<0.000000e+00> : vector<8x16xf32>
    %49 = tpu.matmul %48, %0, %cst_26 {dimension_numbers = #tpu.dot_dimension_numbers<[1], [0], [0], [1], [0, 0, 1, 1], [], []>} : vector<8x50xf32>, vector<50x16xf32>, vector<8x16xf32> -> vector<8x16xf32>
    %c64 = arith.constant 64 : index
    %c0_27 = arith.constant 0 : index
    %50 = vector.load %arg2[%c64, %c0_27] : memref<80x32xf32, #tpu.memory_space<vmem>>, vector<16x32xf32>
    %cst_28 = arith.constant dense<0.000000e+00> : vector<8x32xf32>
    %51 = tpu.matmul %49, %50, %cst_28 {dimension_numbers = #tpu.dot_dimension_numbers<[1], [0], [0], [1], [0, 0, 1, 1], [], []>} : vector<8x16xf32>, vector<16x32xf32>, vector<8x32xf32> -> vector<8x32xf32>
    %52 = arith.addf %43, %51 : vector<8x32xf32>
    %53 = arith.negf %52 : vector<8x32xf32>
    %54 = math.exp %53 : vector<8x32xf32>
    %cst_29 = arith.constant 1.000000e+00 : f32
    %55 = vector.broadcast %cst_29 : f32 to vector<8x32xf32>
    %56 = arith.addf %55, %54 : vector<8x32xf32>
    %57 = arith.divf %55, %56 : vector<8x32xf32>
    %c0_30 = arith.constant 0 : index
    %c0_31 = arith.constant 0 : index
    %58 = vector.load %arg3[%c0_30, %c0_31] : memref<32x32xf32, #tpu.memory_space<vmem>>, vector<32x32xf32>
    %cst_32 = arith.constant dense<0.000000e+00> : vector<8x32xf32>
    %59 = tpu.matmul %57, %58, %cst_32 {dimension_numbers = #tpu.dot_dimension_numbers<[1], [0], [0], [1], [0, 0, 1, 1], [], []>} : vector<8x32xf32>, vector<32x32xf32>, vector<8x32xf32> -> vector<8x32xf32>
    %60 = vector.broadcast %3 : vector<1x32xf32> to vector<8x32xf32>
    %61 = arith.addf %59, %60 : vector<8x32xf32>
    %62 = arith.negf %61 : vector<8x32xf32>
    %63 = math.exp %62 : vector<8x32xf32>
    %cst_33 = arith.constant 1.000000e+00 : f32
    %64 = vector.broadcast %cst_33 : f32 to vector<8x32xf32>
    %65 = arith.addf %64, %63 : vector<8x32xf32>
    %66 = arith.divf %64, %65 : vector<8x32xf32>
    %c0_34 = arith.constant 0 : index
    %c0_35 = arith.constant 0 : index
    %67 = vector.load %arg4[%c0_34, %c0_35] : memref<32x8xf32, #tpu.memory_space<vmem>>, vector<32x8xf32>
    %cst_36 = arith.constant dense<0.000000e+00> : vector<8x8xf32>
    %68 = tpu.matmul %66, %67, %cst_36 {dimension_numbers = #tpu.dot_dimension_numbers<[1], [0], [0], [1], [0, 0, 1, 1], [], []>} : vector<8x32xf32>, vector<32x8xf32>, vector<8x8xf32> -> vector<8x8xf32>
    %69 = vector.broadcast %4 : vector<1x8xf32> to vector<8x8xf32>
    %70 = arith.addf %68, %69 : vector<8x8xf32>
    %cst_37 = arith.constant dense<0xFF800000> : vector<8xf32>
    %71 = vector.multi_reduction <maximumf>, %70, %cst_37 [1] : vector<8x8xf32> to vector<8xf32>
    %72 = vector.shape_cast %71 : vector<8xf32> to vector<8x1xf32>
    %73 = vector.broadcast %72 : vector<8x1xf32> to vector<8x8xf32>
    %74 = arith.subf %70, %73 : vector<8x8xf32>
    %75 = math.exp %74 : vector<8x8xf32>
    %cst_38 = arith.constant dense<0.000000e+00> : vector<8xf32>
    %76 = vector.multi_reduction <add>, %75, %cst_38 [1] : vector<8x8xf32> to vector<8xf32>
    %77 = vector.shape_cast %76 : vector<8xf32> to vector<8x1xf32>
    %78 = math.log %77 : vector<8x1xf32>
    %79 = arith.addf %78, %72 : vector<8x1xf32>
    %80 = vector.broadcast %79 : vector<8x1xf32> to vector<8x8xf32>
    %81 = arith.subf %70, %80 : vector<8x8xf32>
    %c0_39 = arith.constant 0 : index
    %c0_40 = arith.constant 0 : index
    %82 = vector.load %arg6[%c0_39, %c0_40] : memref<8x8xf32, #tpu.memory_space<vmem>>, vector<8x8xf32>
    tpu.vector_store %arg6[%c0_39, %c0_40], %81 {strides = array<i32>} : memref<8x8xf32, #tpu.memory_space<vmem>>, vector<8x8xf32>,
    return
  }
}

</mosaic_0001>

<llo_original>
// kernel: window_classifier_forward.1
$region0: #{window_classifier_forward.1}
  #allocation0 [shape = 'u32[]', space=smem, size = 0x4, offset = 0x4, fixed_abs, tag = 'smem constant byte address 0x4 - core index']
  #allocation1 [shape = 'u32[144,128]{1,0:T(1,128)}', space=vmem, size = 0x12000, scoped, tag = 'internal scratch']
  %s0 = inlined_call_operand.vmem [shape: s32[8,5], index: 0, kind: input, shape index: {}]
  %s1 = inlined_call_operand.vmem [shape: f32[50,16], index: 1, kind: input, shape index: {}]
  %s2 = inlined_call_operand.vmem [shape: f32[80,32], index: 2, kind: input, shape index: {}]
  %s3 = inlined_call_operand.vmem [shape: f32[32,32], index: 3, kind: input, shape index: {}]
  %s4 = inlined_call_operand.vmem [shape: f32[32,8], index: 4, kind: input, shape index: {}]
  %s5 = inlined_call_operand.vmem [shape: f32[3,32], index: 5, kind: input, shape index: {}]
  %s6 = inlined_call_operand.hbm [shape: f32[8,8], index: 6, kind: output, shape index: {}]
  %s7 = sld [smem:[#allocation0]]
  $region34: #{window_classifier_forward.1} parent=0
    _
  %s9 = ssub.s32 1, %s7
  %s10 = scalar_select 0, %s9, %s7
  $region1: #{window_classifier_forward.1} parent=0
    #allocation2 [shape = 'u8[4096]{0}', space=vmem, size = 0x1000, scoped, tag = 'output window, operand 0, single buffered']
    #allocation3 [shape = 's32[1]{0}', space=sflag, size = 0x4, scoped, tag = 'scoped memory for window_classifier_forward.1']
    %11 = vsyncpa [#allocation3], 0
    // Predicated region
    $region2: #{window_classifier_forward.1} parent=1 // pred_check
      _
    $region3: #{window_classifier_forward.1} parent=1 // pred_check_branch
      %13 = sbr.rel (0) target = $region5
    $region4: #{window_classifier_forward.1} parent=1 // pred_region
      _
    $region5: #{window_classifier_forward.1} parent=1 // pred_fallthru
      _
    // Predicated region
    $region6: #{window_classifier_forward.1} parent=1 // pred_check
      _
    $region7: #{window_classifier_forward.1} parent=1 // pred_check_branch
      %15 = sbr.rel (0) target = $region9
    $region8: #{window_classifier_forward.1} parent=1 // pred_region
      _
    $region9: #{window_classifier_forward.1} parent=1 // pred_fallthru
      _
    // Predicated region
    $region10: #{window_classifier_forward.1} parent=1 // pred_check
      _
    $region11: #{window_classifier_forward.1} parent=1 // pred_check_branch
      %17 = sbr.rel (0) target = $region13
    $region12: #{window_classifier_forward.1} parent=1 // pred_region
      _
    $region13: #{window_classifier_forward.1} parent=1 // pred_fallthru
      _
    // Predicated region
    $region14: #{window_classifier_forward.1} parent=1 // pred_check
      _
    $region15: #{window_classifier_forward.1} parent=1 // pred_check_branch
      %19 = sbr.rel (0) target = $region17
    $region16: #{window_classifier_forward.1} parent=1 // pred_region
      _
    $region17: #{window_classifier_forward.1} parent=1 // pred_fallthru
      _
    // Predicated region
    $region18: #{window_classifier_forward.1} parent=1 // pred_check
      _
    $region19: #{window_classifier_forward.1} parent=1 // pred_check_branch
      %21 = sbr.rel (0) target = $region21
    $region20: #{window_classifier_forward.1} parent=1 // pred_region
      _
    $region21: #{window_classifier_forward.1} parent=1 // pred_fallthru
      _
    // Predicated region
    $region22: #{window_classifier_forward.1} parent=1 // pred_check
      _
    $region23: #{window_classifier_forward.1} parent=1 // pred_check_branch
      %23 = sbr.rel (0) target = $region25
    $region24: #{window_classifier_forward.1} parent=1 // pred_region
      _
    $region25: #{window_classifier_forward.1} parent=1 // pred_fallthru
      _
    %v24 = vld [vmem:[%s1] sm:$0xff]
    %v25 = vld [vmem:[%s1 + $0x8] sm:$0xff]
    %v26 = vld [vmem:[%s1 + $0x10] sm:$0xff]
    %v27 = vld [vmem:[%s1 + $0x18] sm:$0xff]
    %v28 = vld [vmem:[%s1 + $0x20] sm:$0xff]
    %v29 = vld [vmem:[%s1 + $0x28] sm:$0xff]
    %v30 = vld [vmem:[%s1 + $0x30] sm:$0x3]
    %v31 = vlaneseq
    %v32 = vand.u32 %v31, 127
    %v33 = vld [vmem:[%s5] sm:$0x1]
    %v34 = vld [vmem:[%s5 + $0x1] sm:$0x1]
    %v35 = vld [vmem:[%s5 + $0x2] sm:$0x1]
    %v36 = vlaneseq
    %v37 = vshrl.u32 %v36, 7
    %v38 = vsub.s32 0, %v37
    %v39 = vrot.slane %v33, %v38
    %v40 = vadd.f32 %v39, 0.0
    %v41 = vld [vmem:[%s0] sm:$0xff]
    %42 = vset.pattern.permute.xlu0 0
    %43 = vperm.xlu0 %42, %v41
    %v44 = vpop.permute.xlu0 %43
    %vm45 = vcmp.eq.s32.totalorder %v32, %v44
    %v46 = vsel %vm45, 1, 0
    %v47 = vcvt.s32.f32 %v46
    %vm48 = vcmask 408576
    %v50 = vsel %vm48, %v47, 0
    %vm52 = vcmask 1041408
    %v54 = vsel %vm52, %v30, 0
    %56 = vmatprep.subr.mxu0 0.0
    %57 = vmatpush1.msra.mxu0 %v24
    %58 = vmatprep.subr.mxu0 0.0
    %59 = vmatpush1.msra.mxu0 %v25
    %60 = vmatprep.subr.mxu0 0.0
    %61 = vmatpush1.msra.mxu0 %v26
    %62 = vmatprep.subr.mxu0 0.0
    %63 = vmatpush1.msra.mxu0 %v27
    %64 = vmatprep.subr.mxu0 0.0
    %65 = vmatpush1.msra.mxu0 %v28
    %66 = vmatprep.subr.mxu0 0.0
    %67 = vmatpush1.msra.mxu0 %v29
    %68 = vmatprep.subr.mxu0 0.0
    %69 = vmatpush1.msra.mxu0 %v54
    %70 = vmatprep.subr.mxu0 0.0
    %71 = vmatpush1.msra.mxu0 0.0
    %72 = vmatprep.subr.mxu0 0.0
    %73 = vmatpush1.msra.mxu0 0.0
    %74 = vmatprep.subr.mxu0 0.0
    %75 = vmatpush1.msra.mxu0 0.0
    %76 = vmatprep.subr.mxu0 0.0
    %77 = vmatpush1.msra.mxu0 0.0
    %78 = vmatprep.subr.mxu0 0.0
    %79 = vmatpush1.msra.mxu0 0.0
    %80 = vmatprep.subr.mxu0 0.0
    %81 = vmatpush1.msra.mxu0 0.0
    %82 = vmatprep.subr.mxu0 0.0
    %83 = vmatpush1.msra.mxu0 0.0
    %84 = vmatprep.subr.mxu0 0.0
    %85 = vmatpush1.msra.mxu0 0.0
    %86 = vmatprep.subr.mxu0 0.0
    %87 = vmatpush1.msra.mxu0 0.0
    %88 = vmatprep.subr.mxu0 0.0
    %89 = vmatpush1.msra.mxu0 0.0
    %90 = vmatprep.subr.mxu0 0.0
    %91 = vmatpush1.msra.mxu0 0.0
    %92 = vmatprep.subr.mxu0 0.0
    %93 = vmatpush1.msra.mxu0 0.0
    %94 = vmatprep.subr.mxu0 0.0
    %95 = vmatpush1.msra.mxu0 0.0
    %96 = vmatprep.subr.mxu0 0.0
    %97 = vmatpush1.msra.mxu0 0.0
    %98 = vmatprep.subr.mxu0 0.0
    %99 = vmatpush1.msra.mxu0 0.0
    %100 = vmatprep.subr.mxu0 0.0
    %101 = vmatpush1.msra.mxu0 0.0
    %102 = vmatprep.subr.mxu0 0.0
    %103 = vmatpush1.msra.mxu0 0.0
    %104 = vmatprep.subr.mxu0 0.0
    %105 = vmatpush1.msra.mxu0 0.0
    %106 = vmatprep.subr.mxu0 0.0
    %107 = vmatpush1.msra.mxu0 0.0
    %108 = vmatprep.subr.mxu0 0.0
    %109 = vmatpush1.msra.mxu0 0.0
    %110 = vmatprep.subr.mxu0 0.0
    %111 = vmatpush1.msra.mxu0 0.0
    %112 = vmatprep.subr.mxu0 0.0
    %113 = vmatpush1.msra.mxu0 0.0
    %114 = vmatprep.subr.mxu0 0.0
    %115 = vmatpush1.msra.mxu0 0.0
    %116 = vmatprep.subr.mxu0 0.0
    %117 = vmatpush1.msra.mxu0 0.0
    %118 = vmatprep.subr.mxu0 0.0
    %119 = vmatpush1.msra.mxu0 0.0
    %120 = vmatprep.mubr.f32.mxu0 0.0
    %121 = vmatmul.mubr.f32.gmra.mrb[0].mxu0 %v50
    %v122 = vpop.f32.mrb[0].mxu0
    %v123 = vadd.f32 0.0, %v122
    %v124 = vpop.f32.mrb[0].mxu0
    %125 = vdwg.mxu0
    %v126 = vld [vmem:[%s2] sm:$0xff]
    %v127 = vld [vmem:[%s2 + $0x8] sm:$0xff]
    %vm128 = vcmask 130048
    %v130 = vsel %vm128, %v123, 0
    %132 = vmatprep.subr.mxu0 0.0
    %133 = vmatpush1.msra.mxu0 %v126
    %134 = vmatprep.subr.mxu0 0.0
    %135 = vmatpush1.msra.mxu0 %v127
    %136 = vmatprep.subr.mxu0 0.0
    %137 = vmatpush1.msra.mxu0 0.0
    %138 = vmatprep.subr.mxu0 0.0
    %139 = vmatpush1.msra.mxu0 0.0
    %140 = vmatprep.subr.mxu0 0.0
    %141 = vmatpush1.msra.mxu0 0.0
    %142 = vmatprep.subr.mxu0 0.0
    %143 = vmatpush1.msra.mxu0 0.0
    %144 = vmatprep.subr.mxu0 0.0
    %145 = vmatpush1.msra.mxu0 0.0
    %146 = vmatprep.subr.mxu0 0.0
    %147 = vmatpush1.msra.mxu0 0.0
    %148 = vmatprep.subr.mxu0 0.0
    %149 = vmatpush1.msra.mxu0 0.0
    %150 = vmatprep.subr.mxu0 0.0
    %151 = vmatpush1.msra.mxu0 0.0
    %152 = vmatprep.subr.mxu0 0.0
    %153 = vmatpush1.msra.mxu0 0.0
    %154 = vmatprep.subr.mxu0 0.0
    %155 = vmatpush1.msra.mxu0 0.0
    %156 = vmatprep.subr.mxu0 0.0
    %157 = vmatpush1.msra.mxu0 0.0
    %158 = vmatprep.subr.mxu0 0.0
    %159 = vmatpush1.msra.mxu0 0.0
    %160 = vmatprep.subr.mxu0 0.0
    %161 = vmatpush1.msra.mxu0 0.0
    %162 = vmatprep.subr.mxu0 0.0
    %163 = vmatpush1.msra.mxu0 0.0
    %164 = vmatprep.subr.mxu0 0.0
    %165 = vmatpush1.msra.mxu0 0.0
    %166 = vmatprep.subr.mxu0 0.0
    %167 = vmatpush1.msra.mxu0 0.0
    %168 = vmatprep.subr.mxu0 0.0
    %169 = vmatpush1.msra.mxu0 0.0
    %170 = vmatprep.subr.mxu0 0.0
    %171 = vmatpush1.msra.mxu0 0.0
    %172 = vmatprep.subr.mxu0 0.0
    %173 = vmatpush1.msra.mxu0 0.0
    %174 = vmatprep.subr.mxu0 0.0
    %175 = vmatpush1.msra.mxu0 0.0
    %176 = vmatprep.subr.mxu0 0.0
    %177 = vmatpush1.msra.mxu0 0.0
    %178 = vmatprep.subr.mxu0 0.0
    %179 = vmatpush1.msra.mxu0 0.0
    %180 = vmatprep.subr.mxu0 0.0
    %181 = vmatpush1.msra.mxu0 0.0
    %182 = vmatprep.subr.mxu0 0.0
    %183 = vmatpush1.msra.mxu0 0.0
    %184 = vmatprep.subr.mxu0 0.0
    %185 = vmatpush1.msra.mxu0 0.0
    %186 = vmatprep.subr.mxu0 0.0
    %187 = vmatpush1.msra.mxu0 0.0
    %188 = vmatprep.subr.mxu0 0.0
    %189 = vmatpush1.msra.mxu0 0.0
    %190 = vmatprep.subr.mxu0 0.0
    %191 = vmatpush1.msra.mxu0 0.0
    %192 = vmatprep.subr.mxu0 0.0
    %193 = vmatpush1.msra.mxu0 0.0
    %194 = vmatprep.subr.mxu0 0.0
    %195 = vmatpush1.msra.mxu0 0.0
    %196 = vmatprep.mubr.f32.mxu0 0.0
    %197 = vmatmul.mubr.f32.gmra.mrb[0].mxu0 %v130
    %v198 = vpop.f32.mrb[0].mxu0
    %v199 = vadd.f32 0.0, %v198
    %v200 = vpop.f32.mrb[0].mxu0
    %201 = vdwg.mxu0
    %v202 = vadd.f32 %v40, %v199
    %203 = vset.pattern.permute.xlu0 1
    %204 = vperm.xlu0 %203, %v41
    %v205 = vpop.permute.xlu0 %204
    %vm206 = vcmp.eq.s32.totalorder %v32, %v205
    %v207 = vsel %vm206, 1, 0
    %v208 = vcvt.s32.f32 %v207
    %v210 = vsel %vm48, %v208, 0
    %212 = vmatprep.subr.mxu0 0.0
    %213 = vmatpush1.msra.mxu0 %v24
    %214 = vmatprep.subr.mxu0 0.0
    %215 = vmatpush1.msra.mxu0 %v25
    %216 = vmatprep.subr.mxu0 0.0
    %217 = vmatpush1.msra.mxu0 %v26
    %218 = vmatprep.subr.mxu0 0.0
    %219 = vmatpush1.msra.mxu0 %v27
    %220 = vmatprep.subr.mxu0 0.0
    %221 = vmatpush1.msra.mxu0 %v28
    %222 = vmatprep.subr.mxu0 0.0
    %223 = vmatpush1.msra.mxu0 %v29
    %224 = vmatprep.subr.mxu0 0.0
    %225 = vmatpush1.msra.mxu0 %v54
    %226 = vmatprep.subr.mxu0 0.0
    %227 = vmatpush1.msra.mxu0 0.0
    %228 = vmatprep.subr.mxu0 0.0
    %229 = vmatpush1.msra.mxu0 0.0
    %230 = vmatprep.subr.mxu0 0.0
    %231 = vmatpush1.msra.mxu0 0.0
    %232 = vmatprep.subr.mxu0 0.0
    %233 = vmatpush1.msra.mxu0 0.0
    %234 = vmatprep.subr.mxu0 0.0
    %235 = vmatpush1.msra.mxu0 0.0
    %236 = vmatprep.subr.mxu0 0.0
    %237 = vmatpush1.msra.mxu0 0.0
    %238 = vmatprep.subr.mxu0 0.0
    %239 = vmatpush1.msra.mxu0 0.0
    %240 = vmatprep.subr.mxu0 0.0
    %241 = vmatpush1.msra.mxu0 0.0
    %242 = vmatprep.subr.mxu0 0.0
    %243 = vmatpush1.msra.mxu0 0.0
    %244 = vmatprep.subr.mxu0 0.0
    %245 = vmatpush1.msra.mxu0 0.0
    %246 = vmatprep.subr.mxu0 0.0
    %247 = vmatpush1.msra.mxu0 0.0
    %248 = vmatprep.subr.mxu0 0.0
    %249 = vmatpush1.msra.mxu0 0.0
    %250 = vmatprep.subr.mxu0 0.0
    %251 = vmatpush1.msra.mxu0 0.0
    %252 = vmatprep.subr.mxu0 0.0
    %253 = vmatpush1.msra.mxu0 0.0
    %254 = vmatprep.subr.mxu0 0.0
    %255 = vmatpush1.msra.mxu0 0.0
    %256 = vmatprep.subr.mxu0 0.0
    %257 = vmatpush1.msra.mxu0 0.0
    %258 = vmatprep.subr.mxu0 0.0
    %259 = vmatpush1.msra.mxu0 0.0
    %260 = vmatprep.subr.mxu0 0.0
    %261 = vmatpush1.msra.mxu0 0.0
    %262 = vmatprep.subr.mxu0 0.0
    %263 = vmatpush1.msra.mxu0 0.0
    %264 = vmatprep.subr.mxu0 0.0
    %265 = vmatpush1.msra.mxu0 0.0
    %266 = vmatprep.subr.mxu0 0.0
    %267 = vmatpush1.msra.mxu0 0.0
    %268 = vmatprep.subr.mxu0 0.0
    %269 = vmatpush1.msra.mxu0 0.0
    %270 = vmatprep.subr.mxu0 0.0
    %271 = vmatpush1.msra.mxu0 0.0
    %272 = vmatprep.subr.mxu0 0.0
    %273 = vmatpush1.msra.mxu0 0.0
    %274 = vmatprep.subr.mxu0 0.0
    %275 = vmatpush1.msra.mxu0 0.0
    %276 = vmatprep.mubr.f32.mxu0 0.0
    %277 = vmatmul.mubr.f32.gmra.mrb[0].mxu0 %v210
    %v278 = vpop.f32.mrb[0].mxu0
    %v279 = vadd.f32 0.0, %v278
    %v280 = vpop.f32.mrb[0].mxu0
    %281 = vdwg.mxu0
    %v282 = vld [vmem:[%s2 + $0x10] sm:$0xff]
    %v283 = vld [vmem:[%s2 + $0x18] sm:$0xff]
    %v285 = vsel %vm128, %v279, 0
    %287 = vmatprep.subr.mxu0 0.0
    %288 = vmatpush1.msra.mxu0 %v282
    %289 = vmatprep.subr.mxu0 0.0
    %290 = vmatpush1.msra.mxu0 %v283
    %291 = vmatprep.subr.mxu0 0.0
    %292 = vmatpush1.msra.mxu0 0.0
    %293 = vmatprep.subr.mxu0 0.0
    %294 = vmatpush1.msra.mxu0 0.0
    %295 = vmatprep.subr.mxu0 0.0
    %296 = vmatpush1.msra.mxu0 0.0
    %297 = vmatprep.subr.mxu0 0.0
    %298 = vmatpush1.msra.mxu0 0.0
    %299 = vmatprep.subr.mxu0 0.0
    %300 = vmatpush1.msra.mxu0 0.0
    %301 = vmatprep.subr.mxu0 0.0
    %302 = vmatpush1.msra.mxu0 0.0
    %303 = vmatprep.subr.mxu0 0.0
    %304 = vmatpush1.msra.mxu0 0.0
    %305 = vmatprep.subr.mxu0 0.0
    %306 = vmatpush1.msra.mxu0 0.0
    %307 = vmatprep.subr.mxu0 0.0
    %308 = vmatpush1.msra.mxu0 0.0
    %309 = vmatprep.subr.mxu0 0.0
    %310 = vmatpush1.msra.mxu0 0.0
    %311 = vmatprep.subr.mxu0 0.0
    %312 = vmatpush1.msra.mxu0 0.0
    %313 = vmatprep.subr.mxu0 0.0
    %314 = vmatpush1.msra.mxu0 0.0
    %315 = vmatprep.subr.mxu0 0.0
    %316 = vmatpush1.msra.mxu0 0.0
    %317 = vmatprep.subr.mxu0 0.0
    %318 = vmatpush1.msra.mxu0 0.0
    %319 = vmatprep.subr.mxu0 0.0
    %320 = vmatpush1.msra.mxu0 0.0
    %321 = vmatprep.subr.mxu0 0.0
    %322 = vmatpush1.msra.mxu0 0.0
    %323 = vmatprep.subr.mxu0 0.0
    %324 = vmatpush1.msra.mxu0 0.0
    %325 = vmatprep.subr.mxu0 0.0
    %326 = vmatpush1.msra.mxu0 0.0
    %327 = vmatprep.subr.mxu0 0.0
    %328 = vmatpush1.msra.mxu0 0.0
    %329 = vmatprep.subr.mxu0 0.0
    %330 = vmatpush1.msra.mxu0 0.0
    %331 = vmatprep.subr.mxu0 0.0
    %332 = vmatpush1.msra.mxu0 0.0
    %333 = vmatprep.subr.mxu0 0.0
    %334 = vmatpush1.msra.mxu0 0.0
    %335 = vmatprep.subr.mxu0 0.0
    %336 = vmatpush1.msra.mxu0 0.0
    %337 = vmatprep.subr.mxu0 0.0
    %338 = vmatpush1.msra.mxu0 0.0
    %339 = vmatprep.subr.mxu0 0.0
    %340 = vmatpush1.msra.mxu0 0.0
    %341 = vmatprep.subr.mxu0 0.0
    %342 = vmatpush1.msra.mxu0 0.0
    %343 = vmatprep.subr.mxu0 0.0
    %344 = vmatpush1.msra.mxu0 0.0
    %345 = vmatprep.subr.mxu0 0.0
    %346 = vmatpush1.msra.mxu0 0.0
    %347 = vmatprep.subr.mxu0 0.0
    %348 = vmatpush1.msra.mxu0 0.0
    %349 = vmatprep.subr.mxu0 0.0
    %350 = vmatpush1.msra.mxu0 0.0
    %351 = vmatprep.mubr.f32.mxu0 0.0
    %352 = vmatmul.mubr.f32.gmra.mrb[0].mxu0 %v285
    %v353 = vpop.f32.mrb[0].mxu0
    %v354 = vadd.f32 0.0, %v353
    %v355 = vpop.f32.mrb[0].mxu0
    %356 = vdwg.mxu0
    %v357 = vadd.f32 %v202, %v354
    %358 = vset.pattern.permute.xlu0 2
    %359 = vperm.xlu0 %358, %v41
    %v360 = vpop.permute.xlu0 %359
    %vm361 = vcmp.eq.s32.totalorder %v32, %v360
    %v362 = vsel %vm361, 1, 0
    %v363 = vcvt.s32.f32 %v362
    %v365 = vsel %vm48, %v363, 0
    %367 = vmatprep.subr.mxu0 0.0
    %368 = vmatpush1.msra.mxu0 %v24
    %369 = vmatprep.subr.mxu0 0.0
    %370 = vmatpush1.msra.mxu0 %v25
    %371 = vmatprep.subr.mxu0 0.0
    %372 = vmatpush1.msra.mxu0 %v26
    %373 = vmatprep.subr.mxu0 0.0
    %374 = vmatpush1.msra.mxu0 %v27
    %375 = vmatprep.subr.mxu0 0.0
    %376 = vmatpush1.msra.mxu0 %v28
    %377 = vmatprep.subr.mxu0 0.0
    %378 = vmatpush1.msra.mxu0 %v29
    %379 = vmatprep.subr.mxu0 0.0
    %380 = vmatpush1.msra.mxu0 %v54
    %381 = vmatprep.subr.mxu0 0.0
    %382 = vmatpush1.msra.mxu0 0.0
    %383 = vmatprep.subr.mxu0 0.0
    %384 = vmatpush1.msra.mxu0 0.0
    %385 = vmatprep.subr.mxu0 0.0
    %386 = vmatpush1.msra.mxu0 0.0
    %387 = vmatprep.subr.mxu0 0.0
    %388 = vmatpush1.msra.mxu0 0.0
    %389 = vmatprep.subr.mxu0 0.0
    %390 = vmatpush1.msra.mxu0 0.0
    %391 = vmatprep.subr.mxu0 0.0
    %392 = vmatpush1.msra.mxu0 0.0
    %393 = vmatprep.subr.mxu0 0.0
    %394 = vmatpush1.msra.mxu0 0.0
    %395 = vmatprep.subr.mxu0 0.0
    %396 = vmatpush1.msra.mxu0 0.0
    %397 = vmatprep.subr.mxu0 0.0
    %398 = vmatpush1.msra.mxu0 0.0
    %399 = vmatprep.subr.mxu0 0.0
    %400 = vmatpush1.msra.mxu0 0.0
    %401 = vmatprep.subr.mxu0 0.0
    %402 = vmatpush1.msra.mxu0 0.0
    %403 = vmatprep.subr.mxu0 0.0
    %404 = vmatpush1.msra.mxu0 0.0
    %405 = vmatprep.subr.mxu0 0.0
    %406 = vmatpush1.msra.mxu0 0.0
    %407 = vmatprep.subr.mxu0 0.0
    %408 = vmatpush1.msra.mxu0 0.0
    %409 = vmatprep.subr.mxu0 0.0
    %410 = vmatpush1.msra.mxu0 0.0
    %411 = vmatprep.subr.mxu0 0.0
    %412 = vmatpush1.msra.mxu0 0.0
    %413 = vmatprep.subr.mxu0 0.0
    %414 = vmatpush1.msra.mxu0 0.0
    %415 = vmatprep.subr.mxu0 0.0
    %416 = vmatpush1.msra.mxu0 0.0
    %417 = vmatprep.subr.mxu0 0.0
    %418 = vmatpush1.msra.mxu0 0.0
    %419 = vmatprep.subr.mxu0 0.0
    %420 = vmatpush1.msra.mxu0 0.0
    %421 = vmatprep.subr.mxu0 0.0
    %422 = vmatpush1.msra.mxu0 0.0
    %423 = vmatprep.subr.mxu0 0.0
    %424 = vmatpush1.msra.mxu0 0.0
    %425 = vmatprep.subr.mxu0 0.0
    %426 = vmatpush1.msra.mxu0 0.0
    %427 = vmatprep.subr.mxu0 0.0
    %428 = vmatpush1.msra.mxu0 0.0
    %429 = vmatprep.subr.mxu0 0.0
    %430 = vmatpush1.msra.mxu0 0.0
    %431 = vmatprep.mubr.f32.mxu0 0.0
    %432 = vmatmul.mubr.f32.gmra.mrb[0].mxu0 %v365
    %v433 = vpop.f32.mrb[0].mxu0
    %v434 = vadd.f32 0.0, %v433
    %v435 = vpop.f32.mrb[0].mxu0
    %436 = vdwg.mxu0
    %v437 = vld [vmem:[%s2 + $0x20] sm:$0xff]
    %v438 = vld [vmem:[%s2 + $0x28] sm:$0xff]
    %v440 = vsel %vm128, %v434, 0
    %442 = vmatprep.subr.mxu0 0.0
    %443 = vmatpush1.msra.mxu0 %v437
    %444 = vmatprep.subr.mxu0 0.0
    %445 = vmatpush1.msra.mxu0 %v438
    %446 = vmatprep.subr.mxu0 0.0
    %447 = vmatpush1.msra.mxu0 0.0
    %448 = vmatprep.subr.mxu0 0.0
    %449 = vmatpush1.msra.mxu0 0.0
    %450 = vmatprep.subr.mxu0 0.0
    %451 = vmatpush1.msra.mxu0 0.0
    %452 = vmatprep.subr.mxu0 0.0
    %453 = vmatpush1.msra.mxu0 0.0
    %454 = vmatprep.subr.mxu0 0.0
    %455 = vmatpush1.msra.mxu0 0.0
    %456 = vmatprep.subr.mxu0 0.0
    %457 = vmatpush1.msra.mxu0 0.0
    %458 = vmatprep.subr.mxu0 0.0
    %459 = vmatpush1.msra.mxu0 0.0
    %460 = vmatprep.subr.mxu0 0.0
    %461 = vmatpush1.msra.mxu0 0.0
    %462 = vmatprep.subr.mxu0 0.0
    %463 = vmatpush1.msra.mxu0 0.0
    %464 = vmatprep.subr.mxu0 0.0
    %465 = vmatpush1.msra.mxu0 0.0
    %466 = vmatprep.subr.mxu0 0.0
    %467 = vmatpush1.msra.mxu0 0.0
    %468 = vmatprep.subr.mxu0 0.0
    %469 = vmatpush1.msra.mxu0 0.0
    %470 = vmatprep.subr.mxu0 0.0
    %471 = vmatpush1.msra.mxu0 0.0
    %472 = vmatprep.subr.mxu0 0.0
    %473 = vmatpush1.msra.mxu0 0.0
    %474 = vmatprep.subr.mxu0 0.0
    %475 = vmatpush1.msra.mxu0 0.0
    %476 = vmatprep.subr.mxu0 0.0
    %477 = vmatpush1.msra.mxu0 0.0
    %478 = vmatprep.subr.mxu0 0.0
    %479 = vmatpush1.msra.mxu0 0.0
    %480 = vmatprep.subr.mxu0 0.0
    %481 = vmatpush1.msra.mxu0 0.0
    %482 = vmatprep.subr.mxu0 0.0
    %483 = vmatpush1.msra.mxu0 0.0
    %484 = vmatprep.subr.mxu0 0.0
    %485 = vmatpush1.msra.mxu0 0.0
    %486 = vmatprep.subr.mxu0 0.0
    %487 = vmatpush1.msra.mxu0 0.0
    %488 = vmatprep.subr.mxu0 0.0
    %489 = vmatpush1.msra.mxu0 0.0
    %490 = vmatprep.subr.mxu0 0.0
    %491 = vmatpush1.msra.mxu0 0.0
    %492 = vmatprep.subr.mxu0 0.0
    %493 = vmatpush1.msra.mxu0 0.0
    %494 = vmatprep.subr.mxu0 0.0
    %495 = vmatpush1.msra.mxu0 0.0
    %496 = vmatprep.subr.mxu0 0.0
    %497 = vmatpush1.msra.mxu0 0.0
    %498 = vmatprep.subr.mxu0 0.0
    %499 = vmatpush1.msra.mxu0 0.0
    %500 = vmatprep.subr.mxu0 0.0
    %501 = vmatpush1.msra.mxu0 0.0
    %502 = vmatprep.subr.mxu0 0.0
    %503 = vmatpush1.msra.mxu0 0.0
    %504 = vmatprep.subr.mxu0 0.0
    %505 = vmatpush1.msra.mxu0 0.0
    %506 = vmatprep.mubr.f32.mxu0 0.0
    %507 = vmatmul.mubr.f32.gmra.mrb[0].mxu0 %v440
    %v508 = vpop.f32.mrb[0].mxu0
    %v509 = vadd.f32 0.0, %v508
    %v510 = vpop.f32.mrb[0].mxu0
    %511 = vdwg.mxu0
    %v512 = vadd.f32 %v357, %v509
    %513 = vset.pattern.permute.xlu0 3
    %514 = vperm.xlu0 %513, %v41
    %v515 = vpop.permute.xlu0 %514
    %vm516 = vcmp.eq.s32.totalorder %v32, %v515
    %v517 = vsel %vm516, 1, 0
    %v518 = vcvt.s32.f32 %v517
    %v520 = vsel %vm48, %v518, 0
    %522 = vmatprep.subr.mxu0 0.0
    %523 = vmatpush1.msra.mxu0 %v24
    %524 = vmatprep.subr.mxu0 0.0
    %525 = vmatpush1.msra.mxu0 %v25
    %526 = vmatprep.subr.mxu0 0.0
    %527 = vmatpush1.msra.mxu0 %v26
    %528 = vmatprep.subr.mxu0 0.0
    %529 = vmatpush1.msra.mxu0 %v27
    %530 = vmatprep.subr.mxu0 0.0
    %531 = vmatpush1.msra.mxu0 %v28
    %532 = vmatprep.subr.mxu0 0.0
    %533 = vmatpush1.msra.mxu0 %v29
    %534 = vmatprep.subr.mxu0 0.0
    %535 = vmatpush1.msra.mxu0 %v54
    %536 = vmatprep.subr.mxu0 0.0
    %537 = vmatpush1.msra.mxu0 0.0
    %538 = vmatprep.subr.mxu0 0.0
    %539 = vmatpush1.msra.mxu0 0.0
    %540 = vmatprep.subr.mxu0 0.0
    %541 = vmatpush1.msra.mxu0 0.0
    %542 = vmatprep.subr.mxu0 0.0
    %543 = vmatpush1.msra.mxu0 0.0
    %544 = vmatprep.subr.mxu0 0.0
    %545 = vmatpush1.msra.mxu0 0.0
    %546 = vmatprep.subr.mxu0 0.0
    %547 = vmatpush1.msra.mxu0 0.0
    %548 = vmatprep.subr.mxu0 0.0
    %549 = vmatpush1.msra.mxu0 0.0
    %550 = vmatprep.subr.mxu0 0.0
    %551 = vmatpush1.msra.mxu0 0.0
    %552 = vmatprep.subr.mxu0 0.0
    %553 = vmatpush1.msra.mxu0 0.0
    %554 = vmatprep.subr.mxu0 0.0
    %555 = vmatpush1.msra.mxu0 0.0
    %556 = vmatprep.subr.mxu0 0.0
    %557 = vmatpush1.msra.mxu0 0.0
    %558 = vmatprep.subr.mxu0 0.0
    %559 = vmatpush1.msra.mxu0 0.0
    %560 = vmatprep.subr.mxu0 0.0
    %561 = vmatpush1.msra.mxu0 0.0
    %562 = vmatprep.subr.mxu0 0.0
    %563 = vmatpush1.msra.mxu0 0.0
    %564 = vmatprep.subr.mxu0 0.0
    %565 = vmatpush1.msra.mxu0 0.0
    %566 = vmatprep.subr.mxu0 0.0
    %567 = vmatpush1.msra.mxu0 0.0
    %568 = vmatprep.subr.mxu0 0.0
    %569 = vmatpush1.msra.mxu0 0.0
    %570 = vmatprep.subr.mxu0 0.0
    %571 = vmatpush1.msra.mxu0 0.0
    %572 = vmatprep.subr.mxu0 0.0
    %573 = vmatpush1.msra.mxu0 0.0
    %574 = vmatprep.subr.mxu0 0.0
    %575 = vmatpush1.msra.mxu0 0.0
    %576 = vmatprep.subr.mxu0 0.0
    %577 = vmatpush1.msra.mxu0 0.0
    %578 = vmatprep.subr.mxu0 0.0
    %579 = vmatpush1.msra.mxu0 0.0
    %580 = vmatprep.subr.mxu0 0.0
    %581 = vmatpush1.msra.mxu0 0.0
    %582 = vmatprep.subr.mxu0 0.0
    %583 = vmatpush1.msra.mxu0 0.0
    %584 = vmatprep.subr.mxu0 0.0
    %585 = vmatpush1.msra.mxu0 0.0
    %586 = vmatprep.mubr.f32.mxu0 0.0
    %587 = vmatmul.mubr.f32.gmra.mrb[0].mxu0 %v520
    %v588 = vpop.f32.mrb[0].mxu0
    %v589 = vadd.f32 0.0, %v588
    %v590 = vpop.f32.mrb[0].mxu0
    %591 = vdwg.mxu0
    %v592 = vld [vmem:[%s2 + $0x30] sm:$0xff]
    %v593 = vld [vmem:[%s2 + $0x38] sm:$0xff]
    %v595 = vsel %vm128, %v589, 0
    %597 = vmatprep.subr.mxu0 0.0
    %598 = vmatpush1.msra.mxu0 %v592
    %599 = vmatprep.subr.mxu0 0.0
    %600 = vmatpush1.msra.mxu0 %v593
    %601 = vmatprep.subr.mxu0 0.0
    %602 = vmatpush1.msra.mxu0 0.0
    %603 = vmatprep.subr.mxu0 0.0
    %604 = vmatpush1.msra.mxu0 0.0
    %605 = vmatprep.subr.mxu0 0.0
    %606 = vmatpush1.msra.mxu0 0.0
    %607 = vmatprep.subr.mxu0 0.0
    %608 = vmatpush1.msra.mxu0 0.0
    %609 = vmatprep.subr.mxu0 0.0
    %610 = vmatpush1.msra.mxu0 0.0
    %611 = vmatprep.subr.mxu0 0.0
    %612 = vmatpush1.msra.mxu0 0.0
    %613 = vmatprep.subr.mxu0 0.0
    %614 = vmatpush1.msra.mxu0 0.0
    %615 = vmatprep.subr.mxu0 0.0
    %616 = vmatpush1.msra.mxu0 0.0
    %617 = vmatprep.subr.mxu0 0.0
    %618 = vmatpush1.msra.mxu0 0.0
    %619 = vmatprep.subr.mxu0 0.0
    %620 = vmatpush1.msra.mxu0 0.0
    %621 = vmatprep.subr.mxu0 0.0
    %622 = vmatpush1.msra.mxu0 0.0
    %623 = vmatprep.subr.mxu0 0.0
    %624 = vmatpush1.msra.mxu0 0.0
    %625 = vmatprep.subr.mxu0 0.0
    %626 = vmatpush1.msra.mxu0 0.0
    %627 = vmatprep.subr.mxu0 0.0
    %628 = vmatpush1.msra.mxu0 0.0
    %629 = vmatprep.subr.mxu0 0.0
    %630 = vmatpush1.msra.mxu0 0.0
    %631 = vmatprep.subr.mxu0 0.0
    %632 = vmatpush1.msra.mxu0 0.0
    %633 = vmatprep.subr.mxu0 0.0
    %634 = vmatpush1.msra.mxu0 0.0
    %635 = vmatprep.subr.mxu0 0.0
    %636 = vmatpush1.msra.mxu0 0.0
    %637 = vmatprep.subr.mxu0 0.0
    %638 = vmatpush1.msra.mxu0 0.0
    %639 = vmatprep.subr.mxu0 0.0
    %640 = vmatpush1.msra.mxu0 0.0
    %641 = vmatprep.subr.mxu0 0.0
    %642 = vmatpush1.msra.mxu0 0.0
    %643 = vmatprep.subr.mxu0 0.0
    %644 = vmatpush1.msra.mxu0 0.0
    %645 = vmatprep.subr.mxu0 0.0
    %646 = vmatpush1.msra.mxu0 0.0
    %647 = vmatprep.subr.mxu0 0.0
    %648 = vmatpush1.msra.mxu0 0.0
    %649 = vmatprep.subr.mxu0 0.0
    %650 = vmatpush1.msra.mxu0 0.0
    %651 = vmatprep.subr.mxu0 0.0
    %652 = vmatpush1.msra.mxu0 0.0
    %653 = vmatprep.subr.mxu0 0.0
    %654 = vmatpush1.msra.mxu0 0.0
    %655 = vmatprep.subr.mxu0 0.0
    %656 = vmatpush1.msra.mxu0 0.0
    %657 = vmatprep.subr.mxu0 0.0
    %658 = vmatpush1.msra.mxu0 0.0
    %659 = vmatprep.subr.mxu0 0.0
    %660 = vmatpush1.msra.mxu0 0.0
    %661 = vmatprep.mubr.f32.mxu0 0.0
    %662 = vmatmul.mubr.f32.gmra.mrb[0].mxu0 %v595
    %v663 = vpop.f32.mrb[0].mxu0
    %v664 = vadd.f32 0.0, %v663
    %v665 = vpop.f32.mrb[0].mxu0
    %666 = vdwg.mxu0
    %v667 = vadd.f32 %v512, %v664
    %668 = vset.pattern.permute.xlu0 4
    %669 = vperm.xlu0 %668, %v41
    %v670 = vpop.permute.xlu0 %669
    %vm671 = vcmp.eq.s32.totalorder %v32, %v670
    %v672 = vsel %vm671, 1, 0
    %v673 = vcvt.s32.f32 %v672
    %v675 = vsel %vm48, %v673, 0
    %677 = vmatprep.subr.mxu0 0.0
    %678 = vmatpush1.msra.mxu0 %v24
    %679 = vmatprep.subr.mxu0 0.0
    %680 = vmatpush1.msra.mxu0 %v25
    %681 = vmatprep.subr.mxu0 0.0
    %682 = vmatpush1.msra.mxu0 %v26
    %683 = vmatprep.subr.mxu0 0.0
    %684 = vmatpush1.msra.mxu0 %v27
    %685 = vmatprep.subr.mxu0 0.0
    %686 = vmatpush1.msra.mxu0 %v28
    %687 = vmatprep.subr.mxu0 0.0
    %688 = vmatpush1.msra.mxu0 %v29
    %689 = vmatprep.subr.mxu0 0.0
    %690 = vmatpush1.msra.mxu0 %v54
    %691 = vmatprep.subr.mxu0 0.0
    %692 = vmatpush1.msra.mxu0 0.0
    %693 = vmatprep.subr.mxu0 0.0
    %694 = vmatpush1.msra.mxu0 0.0
    %695 = vmatprep.subr.mxu0 0.0
    %696 = vmatpush1.msra.mxu0 0.0
    %697 = vmatprep.subr.mxu0 0.0
    %698 = vmatpush1.msra.mxu0 0.0
    %699 = vmatprep.subr.mxu0 0.0
    %700 = vmatpush1.msra.mxu0 0.0
    %701 = vmatprep.subr.mxu0 0.0
    %702 = vmatpush1.msra.mxu0 0.0
    %703 = vmatprep.subr.mxu0 0.0
    %704 = vmatpush1.msra.mxu0 0.0
    %705 = vmatprep.subr.mxu0 0.0
    %706 = vmatpush1.msra.mxu0 0.0
    %707 = vmatprep.subr.mxu0 0.0
    %708 = vmatpush1.msra.mxu0 0.0
    %709 = vmatprep.subr.mxu0 0.0
    %710 = vmatpush1.msra.mxu0 0.0
    %711 = vmatprep.subr.mxu0 0.0
    %712 = vmatpush1.msra.mxu0 0.0
    %713 = vmatprep.subr.mxu0 0.0
    %714 = vmatpush1.msra.mxu0 0.0
    %715 = vmatprep.subr.mxu0 0.0
    %716 = vmatpush1.msra.mxu0 0.0
    %717 = vmatprep.subr.mxu0 0.0
    %718 = vmatpush1.msra.mxu0 0.0
    %719 = vmatprep.subr.mxu0 0.0
    %720 = vmatpush1.msra.mxu0 0.0
    %721 = vmatprep.subr.mxu0 0.0
    %722 = vmatpush1.msra.mxu0 0.0
    %723 = vmatprep.subr.mxu0 0.0
    %724 = vmatpush1.msra.mxu0 0.0
    %725 = vmatprep.subr.mxu0 0.0
    %726 = vmatpush1.msra.mxu0 0.0
    %727 = vmatprep.subr.mxu0 0.0
    %728 = vmatpush1.msra.mxu0 0.0
    %729 = vmatprep.subr.mxu0 0.0
    %730 = vmatpush1.msra.mxu0 0.0
    %731 = vmatprep.subr.mxu0 0.0
    %732 = vmatpush1.msra.mxu0 0.0
    %733 = vmatprep.subr.mxu0 0.0
    %734 = vmatpush1.msra.mxu0 0.0
    %735 = vmatprep.subr.mxu0 0.0
    %736 = vmatpush1.msra.mxu0 0.0
    %737 = vmatprep.subr.mxu0 0.0
    %738 = vmatpush1.msra.mxu0 0.0
    %739 = vmatprep.subr.mxu0 0.0
    %740 = vmatpush1.msra.mxu0 0.0
    %741 = vmatprep.mubr.f32.mxu0 0.0
    %742 = vmatmul.mubr.f32.gmra.mrb[0].mxu0 %v675
    %v743 = vpop.f32.mrb[0].mxu0
    %v744 = vadd.f32 0.0, %v743
    %v745 = vpop.f32.mrb[0].mxu0
    %746 = vdwg.mxu0
    %v747 = vld [vmem:[%s2 + $0x40] sm:$0xff]
    %v748 = vld [vmem:[%s2 + $0x48] sm:$0xff]
    %v750 = vsel %vm128, %v744, 0
    %752 = vmatprep.subr.mxu0 0.0
    %753 = vmatpush1.msra.mxu0 %v747
    %754 = vmatprep.subr.mxu0 0.0
    %755 = vmatpush1.msra.mxu0 %v748
    %756 = vmatprep.subr.mxu0 0.0
    %757 = vmatpush1.msra.mxu0 0.0
    %758 = vmatprep.subr.mxu0 0.0
    %759 = vmatpush1.msra.mxu0 0.0
    %760 = vmatprep.subr.mxu0 0.0
    %761 = vmatpush1.msra.mxu0 0.0
    %762 = vmatprep.subr.mxu0 0.0
    %763 = vmatpush1.msra.mxu0 0.0
    %764 = vmatprep.subr.mxu0 0.0
    %765 = vmatpush1.msra.mxu0 0.0
    %766 = vmatprep.subr.mxu0 0.0
    %767 = vmatpush1.msra.mxu0 0.0
    %768 = vmatprep.subr.mxu0 0.0
    %769 = vmatpush1.msra.mxu0 0.0
    %770 = vmatprep.subr.mxu0 0.0
    %771 = vmatpush1.msra.mxu0 0.0
    %772 = vmatprep.subr.mxu0 0.0
    %773 = vmatpush1.msra.mxu0 0.0
    %774 = vmatprep.subr.mxu0 0.0
    %775 = vmatpush1.msra.mxu0 0.0
    %776 = vmatprep.subr.mxu0 0.0
    %777 = vmatpush1.msra.mxu0 0.0
    %778 = vmatprep.subr.mxu0 0.0
    %779 = vmatpush1.msra.mxu0 0.0
    %780 = vmatprep.subr.mxu0 0.0
    %781 = vmatpush1.msra.mxu0 0.0
    %782 = vmatprep.subr.mxu0 0.0
    %783 = vmatpush1.msra.mxu0 0.0
    %784 = vmatprep.subr.mxu0 0.0
    %785 = vmatpush1.msra.mxu0 0.0
    %786 = vmatprep.subr.mxu0 0.0
    %787 = vmatpush1.msra.mxu0 0.0
    %788 = vmatprep.subr.mxu0 0.0
    %789 = vmatpush1.msra.mxu0 0.0
    %790 = vmatprep.subr.mxu0 0.0
    %791 = vmatpush1.msra.mxu0 0.0
    %792 = vmatprep.subr.mxu0 0.0
    %793 = vmatpush1.msra.mxu0 0.0
    %794 = vmatprep.subr.mxu0 0.0
    %795 = vmatpush1.msra.mxu0 0.0
    %796 = vmatprep.subr.mxu0 0.0
    %797 = vmatpush1.msra.mxu0 0.0
    %798 = vmatprep.subr.mxu0 0.0
    %799 = vmatpush1.msra.mxu0 0.0
    %800 = vmatprep.subr.mxu0 0.0
    %801 = vmatpush1.msra.mxu0 0.0
    %802 = vmatprep.subr.mxu0 0.0
    %803 = vmatpush1.msra.mxu0 0.0
    %804 = vmatprep.subr.mxu0 0.0
    %805 = vmatpush1.msra.mxu0 0.0
    %806 = vmatprep.subr.mxu0 0.0
    %807 = vmatpush1.msra.mxu0 0.0
    %808 = vmatprep.subr.mxu0 0.0
    %809 = vmatpush1.msra.mxu0 0.0
    %810 = vmatprep.subr.mxu0 0.0
    %811 = vmatpush1.msra.mxu0 0.0
    %812 = vmatprep.subr.mxu0 0.0
    %813 = vmatpush1.msra.mxu0 0.0
    %814 = vmatprep.subr.mxu0 0.0
    %815 = vmatpush1.msra.mxu0 0.0
    %816 = vmatprep.mubr.f32.mxu0 0.0
    %817 = vmatmul.mubr.f32.gmra.mrb[0].mxu0 %v750
    %v818 = vpop.f32.mrb[0].mxu0
    %v819 = vadd.f32 0.0, %v818
    %v820 = vpop.f32.mrb[0].mxu0
    %821 = vdwg.mxu0
    %v822 = vadd.f32 %v667, %v819
    %v823 = vxor.u32 %v822, 2147483648
    %v824 = vmul.f32 %v823, 1.442695
    %v825 = vpow.pop %v824
    %v826 = vadd.f32 %v825, 1.0
    %v827 = vrcp.pop %v826
    %v828 = vmul.f32 1.0, %v827
    %v829 = vld [vmem:[%s3] sm:$0xff]
    %v830 = vld [vmem:[%s3 + $0x8] sm:$0xff]
    %v831 = vld [vmem:[%s3 + $0x10] sm:$0xff]
    %v832 = vld [vmem:[%s3 + $0x18] sm:$0xff]
    %v833 = vlaneseq
    %v834 = vshrl.u32 %v833, 7
    %v835 = vsub.s32 0, %v834
    %v836 = vrot.slane %v34, %v835
    %vm837 = vcmask 261120
    %v839 = vsel %vm837, %v828, 0
    %841 = vmatprep.subr.mxu0 0.0
    %842 = vmatpush1.msra.mxu0 %v829
    %843 = vmatprep.subr.mxu0 0.0
    %844 = vmatpush1.msra.mxu0 %v830
    %845 = vmatprep.subr.mxu0 0.0
    %846 = vmatpush1.msra.mxu0 %v831
    %847 = vmatprep.subr.mxu0 0.0
    %848 = vmatpush1.msra.mxu0 %v832
    %849 = vmatprep.subr.mxu0 0.0
    %850 = vmatpush1.msra.mxu0 0.0
    %851 = vmatprep.subr.mxu0 0.0
    %852 = vmatpush1.msra.mxu0 0.0
    %853 = vmatprep.subr.mxu0 0.0
    %854 = vmatpush1.msra.mxu0 0.0
    %855 = vmatprep.subr.mxu0 0.0
    %856 = vmatpush1.msra.mxu0 0.0
    %857 = vmatprep.subr.mxu0 0.0
    %858 = vmatpush1.msra.mxu0 0.0
    %859 = vmatprep.subr.mxu0 0.0
    %860 = vmatpush1.msra.mxu0 0.0
    %861 = vmatprep.subr.mxu0 0.0
    %862 = vmatpush1.msra.mxu0 0.0
    %863 = vmatprep.subr.mxu0 0.0
    %864 = vmatpush1.msra.mxu0 0.0
    %865 = vmatprep.subr.mxu0 0.0
    %866 = vmatpush1.msra.mxu0 0.0
    %867 = vmatprep.subr.mxu0 0.0
    %868 = vmatpush1.msra.mxu0 0.0
    %869 = vmatprep.subr.mxu0 0.0
    %870 = vmatpush1.msra.mxu0 0.0
    %871 = vmatprep.subr.mxu0 0.0
    %872 = vmatpush1.msra.mxu0 0.0
    %873 = vmatprep.subr.mxu0 0.0
    %874 = vmatpush1.msra.mxu0 0.0
    %875 = vmatprep.subr.mxu0 0.0
    %876 = vmatpush1.msra.mxu0 0.0
    %877 = vmatprep.subr.mxu0 0.0
    %878 = vmatpush1.msra.mxu0 0.0
    %879 = vmatprep.subr.mxu0 0.0
    %880 = vmatpush1.msra.mxu0 0.0
    %881 = vmatprep.subr.mxu0 0.0
    %882 = vmatpush1.msra.mxu0 0.0
    %883 = vmatprep.subr.mxu0 0.0
    %884 = vmatpush1.msra.mxu0 0.0
    %885 = vmatprep.subr.mxu0 0.0
    %886 = vmatpush1.msra.mxu0 0.0
    %887 = vmatprep.subr.mxu0 0.0
    %888 = vmatpush1.msra.mxu0 0.0
    %889 = vmatprep.subr.mxu0 0.0
    %890 = vmatpush1.msra.mxu0 0.0
    %891 = vmatprep.subr.mxu0 0.0
    %892 = vmatpush1.msra.mxu0 0.0
    %893 = vmatprep.subr.mxu0 0.0
    %894 = vmatpush1.msra.mxu0 0.0
    %895 = vmatprep.subr.mxu0 0.0
    %896 = vmatpush1.msra.mxu0 0.0
    %897 = vmatprep.subr.mxu0 0.0
    %898 = vmatpush1.msra.mxu0 0.0
    %899 = vmatprep.subr.mxu0 0.0
    %900 = vmatpush1.msra.mxu0 0.0
    %901 = vmatprep.subr.mxu0 0.0
    %902 = vmatpush1.msra.mxu0 0.0
    %903 = vmatprep.subr.mxu0 0.0
    %904 = vmatpush1.msra.mxu0 0.0
    %905 = vmatprep.mubr.f32.mxu0 0.0
    %906 = vmatmul.mubr.f32.gmra.mrb[0].mxu0 %v839
    %v907 = vpop.f32.mrb[0].mxu0
    %v908 = vadd.f32 %v836, %v907
    %v909 = vpop.f32.mrb[0].mxu0
    %910 = vdwg.mxu0
    %v911 = vxor.u32 %v908, 2147483648
    %v912 = vmul.f32 %v911, 1.442695
    %v913 = vpow.pop %v912
    %v914 = vadd.f32 %v913, 1.0
    %v915 = vrcp.pop %v914
    %v916 = vmul.f32 1.0, %v915
    %v917 = vld [vmem:[%s4] sm:$0xff]
    %v918 = vld [vmem:[%s4 + $0x8] sm:$0xff]
    %v919 = vld [vmem:[%s4 + $0x10] sm:$0xff]
    %v920 = vld [vmem:[%s4 + $0x18] sm:$0xff]
    %v921 = vlaneseq
    %v922 = vshrl.u32 %v921, 7
    %v923 = vsub.s32 0, %v922
    %v924 = vrot.slane %v35, %v923
    %v926 = vsel %vm837, %v916, 0
    %928 = vmatprep.subr.mxu0 0.0
    %929 = vmatpush1.msra.mxu0 %v917
    %930 = vmatprep.subr.mxu0 0.0
    %931 = vmatpush1.msra.mxu0 %v918
    %932 = vmatprep.subr.mxu0 0.0
    %933 = vmatpush1.msra.mxu0 %v919
    %934 = vmatprep.subr.mxu0 0.0
    %935 = vmatpush1.msra.mxu0 %v920
    %936 = vmatprep.subr.mxu0 0.0
    %937 = vmatpush1.msra.mxu0 0.0
    %938 = vmatprep.subr.mxu0 0.0
    %939 = vmatpush1.msra.mxu0 0.0
    %940 = vmatprep.subr.mxu0 0.0
    %941 = vmatpush1.msra.mxu0 0.0
    %942 = vmatprep.subr.mxu0 0.0
    %943 = vmatpush1.msra.mxu0 0.0
    %944 = vmatprep.subr.mxu0 0.0
    %945 = vmatpush1.msra.mxu0 0.0
    %946 = vmatprep.subr.mxu0 0.0
    %947 = vmatpush1.msra.mxu0 0.0
    %948 = vmatprep.subr.mxu0 0.0
    %949 = vmatpush1.msra.mxu0 0.0
    %950 = vmatprep.subr.mxu0 0.0
    %951 = vmatpush1.msra.mxu0 0.0
    %952 = vmatprep.subr.mxu0 0.0
    %953 = vmatpush1.msra.mxu0 0.0
    %954 = vmatprep.subr.mxu0 0.0
    %955 = vmatpush1.msra.mxu0 0.0
    %956 = vmatprep.subr.mxu0 0.0
    %957 = vmatpush1.msra.mxu0 0.0
    %958 = vmatprep.subr.mxu0 0.0
    %959 = vmatpush1.msra.mxu0 0.0
    %960 = vmatprep.subr.mxu0 0.0
    %961 = vmatpush1.msra.mxu0 0.0
    %962 = vmatprep.subr.mxu0 0.0
    %963 = vmatpush1.msra.mxu0 0.0
    %964 = vmatprep.subr.mxu0 0.0
    %965 = vmatpush1.msra.mxu0 0.0
    %966 = vmatprep.subr.mxu0 0.0
    %967 = vmatpush1.msra.mxu0 0.0
    %968 = vmatprep.subr.mxu0 0.0
    %969 = vmatpush1.msra.mxu0 0.0
    %970 = vmatprep.subr.mxu0 0.0
    %971 = vmatpush1.msra.mxu0 0.0
    %972 = vmatprep.subr.mxu0 0.0
    %973 = vmatpush1.msra.mxu0 0.0
    %974 = vmatprep.subr.mxu0 0.0
    %975 = vmatpush1.msra.mxu0 0.0
    %976 = vmatprep.subr.mxu0 0.0
    %977 = vmatpush1.msra.mxu0 0.0
    %978 = vmatprep.subr.mxu0 0.0
    %979 = vmatpush1.msra.mxu0 0.0
    %980 = vmatprep.subr.mxu0 0.0
    %981 = vmatpush1.msra.mxu0 0.0
    %982 = vmatprep.subr.mxu0 0.0
    %983 = vmatpush1.msra.mxu0 0.0
    %984 = vmatprep.subr.mxu0 0.0
    %985 = vmatpush1.msra.mxu0 0.0
    %986 = vmatprep.subr.mxu0 0.0
    %987 = vmatpush1.msra.mxu0 0.0
    %988 = vmatprep.subr.mxu0 0.0
    %989 = vmatpush1.msra.mxu0 0.0
    %990 = vmatprep.subr.mxu0 0.0
    %991 = vmatpush1.msra.mxu0 0.0
    %992 = vmatprep.mubr.f32.mxu0 0.0
    %993 = vmatmul.mubr.f32.gmra.mrb[0].mxu0 %v926
    %v994 = vpop.f32.mrb[0].mxu0
    %v995 = vadd.f32 %v924, %v994
    %v996 = vpop.f32.mrb[0].mxu0
    %997 = vdwg.mxu0
    %vm998 = vcmask 64512
    %v999 = vsel %vm998, %v995, -inf
    %1000 = vmax.xlane.f32.xlu0 %v999
    %v1001 = vpop.xlane.xlu0 %1000
    %v1002 = vsub.f32 %v995, %v1001
    %v1003 = vmul.f32 %v1002, 1.442695
    %v1004 = vpow.pop %v1003
    %v1005 = vsel %vm998, %v1004, 0.0
    %1006 = vadd.xlane.f32.xlu0 %v1005
    %v1007 = vpop.xlane.xlu0 %1006
    %v1008 = vlog2.pop %v1007
    %v1009 = vmul.f32 %v1008, 0.6931472
    %v1010 = vadd.f32 %v1009, %v1001
    %v1011 = vsub.f32 %v995, %v1010
    %1012 = vst.msk [vmem:[#allocation2] sm:$0xff] %vm998, %v1011
    // Predicated region
    $region26: #{window_classifier_forward.1} parent=1 // pred_check
      _
    $region27: #{window_classifier_forward.1} parent=1 // pred_check_branch
      %1014 = sbr.rel (0) target = $region29
    $region28: #{window_classifier_forward.1} parent=1 // pred_region
      %s1016 = ssub.s32 128, 128
      %1017 = vsyncadd [#allocation3], %s1016
      %s1019 = sshll.u32 [#allocation2], 4
      %s1020 = int_to_ptr.vmem [resolvable:$true] %s1019
      %1022 = dma.vmem_to_hbm [thread:$0]  %s1020, 128, %s6, [#allocation3]
    $region29: #{window_classifier_forward.1} parent=1 // pred_fallthru
      _
    // Predicated region
    $region30: #{window_classifier_forward.1} parent=1 // pred_check
      _
    $region31: #{window_classifier_forward.1} parent=1 // pred_check_branch
      %1024 = sbr.rel (0) target = $region33
    $region32: #{window_classifier_forward.1} parent=1 // pred_region
      %1025 = dma.done [#allocation3], 128
    $region33: #{window_classifier_forward.1} parent=1 // pred_fallthru
      _
    %1026 = vsyncpa [#allocation3], 1

</llo_original>
